<compile_context>
chip_gen: v5e
topology: v5e:2x2
jax: 0.10.0
libtpu: 0.0.40
codegen_flags: <defaults>
</compile_context>

<pallas_src>
import functools

import jax
import jax.numpy as jnp
from jax.experimental import pallas as pl
from jax.experimental.pallas import tpu as pltpu

LANE = 128
SUBLANE = 8


def _round_up(x, m):
    return ((x + m - 1) // m) * m


# --------------------------------------------------------------------------- #
# Kernels
# --------------------------------------------------------------------------- #
def dqn_kernel(x_ref, w1_ref, b1_ref, w2_ref, b2_ref, o_ref):
    # x:  [TB, S]      w1: [S, Hp] (Hp padded to 128)   b1: [1, Hp] f32
    # w2: [Hp, A]      b2: [1, A]  f32                  o:  [TB, A] f32
    x = x_ref[...].astype(w1_ref.dtype)                     # cast to MXU dtype in-kernel
    h1 = jnp.dot(x, w1_ref[...], preferred_element_type=jnp.float32) + b1_ref[...]
    a1 = jnp.maximum(h1, 0.0).astype(w2_ref.dtype)          # ReLU in f32, cast for MXU
    q = jnp.dot(a1, w2_ref[...], preferred_element_type=jnp.float32) + b2_ref[...]
    o_ref[...] = q.astype(o_ref.dtype)


def dqn_argmax_kernel(x_ref, w1_ref, b1_ref, w2_ref, b2_ref, a_ref):
    # Same Q computation, but fuses greedy-action selection: emits int32 [TB, 1].
    x = x_ref[...].astype(w1_ref.dtype)
    h1 = jnp.dot(x, w1_ref[...], preferred_element_type=jnp.float32) + b1_ref[...]
    a1 = jnp.maximum(h1, 0.0).astype(w2_ref.dtype)
    q = jnp.dot(a1, w2_ref[...], preferred_element_type=jnp.float32) + b2_ref[...]
    n_act = q.shape[-1]
    col = jax.lax.broadcasted_iota(jnp.int32, q.shape, 1)
    qmax = jnp.max(q, axis=-1, keepdims=True)
    # First index attaining the max (matches torch/np argmax tie-breaking).
    first = jnp.min(jnp.where(q == qmax, col, n_act), axis=-1, keepdims=True)
    a_ref[...] = first.astype(a_ref.dtype)


# --------------------------------------------------------------------------- #
# Parameter prep (one-time, outside the hot path)
# --------------------------------------------------------------------------- #
def prepare_dqn_params(w1, b1, w2, b2, compute_dtype=jnp.bfloat16):
    """Convert PyTorch Linear layout ([out, in] weights, [out] biases) to kernel
    layout: pre-transposed [in, out] weights, hidden dim zero-padded to 128 lanes,
    biases as (1, n) f32 rows.  bf16 MXU operands by default (f32 accumulation)."""
    H, S = w1.shape
    A, _ = w2.shape
    Hp = _round_up(H, LANE)
    w1_t = jnp.zeros((S, Hp), compute_dtype).at[:, :H].set(w1.T.astype(compute_dtype))
    b1_p = jnp.zeros((1, Hp), jnp.float32).at[0, :H].set(b1.astype(jnp.float32))
    w2_t = jnp.zeros((Hp, A), compute_dtype).at[:H, :].set(w2.T.astype(compute_dtype))
    b2_p = b2.astype(jnp.float32).reshape(1, A)
    return w1_t, b1_p, w2_t, b2_p


# --------------------------------------------------------------------------- #
# Wrapper
# --------------------------------------------------------------------------- #
def _batch_tile(B, block_batch):
    """Batch tile: multiple of 8 sublanes, capped at block_batch, and capped at
    ~ceil(B/2) so the grid has >= 2 steps (both v7x TensorCores get work)."""
    if B <= SUBLANE:
        return B                                     # full-array block, no padding
    TB = min(block_batch, _round_up(B, SUBLANE))
    TB = min(TB, _round_up(pl.cdiv(B, 2), SUBLANE))  # guarantee >= 2 grid steps
    return max(TB, SUBLANE)


def _dqn_call(kernel, x, params, out_dtype, out_cols, block_batch):
    w1_t, b1, w2_t, b2 = params
    B, S = x.shape
    Hp = w1_t.shape[1]
    A = w2_t.shape[1]

    TB = _batch_tile(B, block_batch)
    grid = (pl.cdiv(B, TB),)      # ragged last block handled by Pallas (no jnp.pad)

    return pl.pallas_call(
        kernel,
        out_shape=jax.ShapeDtypeStruct((B, out_cols), out_dtype),
        grid=grid,
        in_specs=[
            pl.BlockSpec((TB, S), lambda i: (i, 0)),   # x: tiled over batch, contiguous slab
            pl.BlockSpec((S, Hp), lambda i: (0, 0)),   # weights/biases: DMA'd once,
            pl.BlockSpec((1, Hp), lambda i: (0, 0)),   # VMEM-resident across the grid
            pl.BlockSpec((Hp, A), lambda i: (0, 0)),
            pl.BlockSpec((1, A), lambda i: (0, 0)),
        ],
        out_specs=pl.BlockSpec((TB, out_cols), lambda i: (i, 0)),  # unpadded writeback
        compiler_params=pltpu.CompilerParams(
            dimension_semantics=("parallel",),          # shard batch across v7x's 2 TCs
            vmem_limit_bytes=32 * 1024 * 1024,          # portable to v7x's smaller VMEM
        ),
    )(x, w1_t, b1, w2_t, b2)


@functools.partial(jax.jit, static_argnames=("block_batch",))
def dqn_forward(x, params, *, block_batch=4096):
    """x: [B, S] (any B, any float dtype); params from prepare_dqn_params.
    Returns Q-values [B, action_shape] in f32 (same semantics as DQN.forward)."""
    A = params[2].shape[1]
    return _dqn_call(dqn_kernel, x, params, jnp.float32, A, block_batch)


@functools.partial(jax.jit, static_argnames=("block_batch",))
def dqn_act(x, params, *, block_batch=4096):
    """Fused greedy action: argmax_a Q(x, a). Returns int32 [B]."""
    out = _dqn_call(dqn_argmax_kernel, x, params, jnp.int32, 1, block_batch)
    return out[:, 0]


def init_dqn_params(key, state_shape, action_shape, hidden_shape=24):
    """PyTorch nn.Linear-style init (U[-1/sqrt(fan_in), +1/sqrt(fan_in)]),
    in the original PyTorch layout ([out, in] weights)."""
    k1, k2, k3, k4 = jax.random.split(key, 4)
    bound1 = 1.0 / (state_shape ** 0.5)
    bound2 = 1.0 / (hidden_shape ** 0.5)
    w1 = jax.random.uniform(k1, (hidden_shape, state_shape), jnp.float32, -bound1, bound1)
    b1 = jax.random.uniform(k2, (hidden_shape,), jnp.float32, -bound1, bound1)
    w2 = jax.random.uniform(k3, (action_shape, hidden_shape), jnp.float32, -bound2, bound2)
    b2 = jax.random.uniform(k4, (action_shape,), jnp.float32, -bound2, bound2)
    return w1, b1, w2, b2


if __name__ == "__main__":
    key = jax.random.PRNGKey(0)
    state_shape, hidden_shape, action_shape = 16, 24, 8

    k_x, k_p, k_x2 = jax.random.split(key, 3)
    w1, b1, w2, b2 = init_dqn_params(k_p, state_shape, action_shape, hidden_shape)

    def ref_f32(x):
        h1 = x @ w1.T + b1
        return jnp.maximum(h1, 0.0) @ w2.T + b2

    def ref_bf16_operands(x):
        # Same math as the bf16-MXU kernel path: bf16 operands, f32 accumulation.
        f = lambda a: a.astype(jnp.bfloat16).astype(jnp.float32)
        h1 = f(x) @ f(w1).T + b1
        a1 = jnp.maximum(h1, 0.0)
        return f(a1) @ f(w2).T + b2

    # --- f32 compute path, tiny batch (B=2): tight check vs PyTorch-equivalent ref ---
    x_small = jax.random.normal(k_x, (2, state_shape), jnp.float32)
    params_f32 = prepare_dqn_params(w1, b1, w2, b2, compute_dtype=jnp.float32)
    out_f32 = jax.block_until_ready(dqn_forward(x_small, params_f32))
    assert out_f32.shape == (2, action_shape)
    assert jnp.allclose(out_f32, ref_f32(x_small), atol=1e-5, rtol=1e-5), "f32 path mismatch"

    # --- default bf16-MXU path, ragged multi-step grid (B=50 -> TB=32, grid=2) ---
    x_ragged = jax.random.normal(k_x2, (50, state_shape), jnp.float32)
    params_bf16 = prepare_dqn_params(w1, b1, w2, b2)  # bf16 default
    out_bf16 = jax.block_until_ready(dqn_forward(x_ragged, params_bf16, block_batch=2048))
    assert out_bf16.shape == (50, action_shape)
    assert jnp.allclose(out_bf16, ref_bf16_operands(x_ragged), atol=1e-3, rtol=1e-3), \
        "bf16 path mismatch vs bf16-operand reference"
    assert jnp.allclose(out_bf16, ref_f32(x_ragged), atol=5e-2, rtol=5e-2), \
        "bf16 path too far from f32 reference"

    # --- fused greedy-action kernel matches argmax of the Q kernel ---
    act = jax.block_until_ready(dqn_act(x_ragged, params_f32, block_batch=2048))
    q_full = dqn_forward(x_ragged, params_f32, block_batch=2048)
    assert act.shape == (50,)
    assert jnp.array_equal(act, jnp.argmax(q_full, axis=-1)), "fused argmax mismatch"

    print("KERNEL_OK")
</pallas_src>

<mosaic_0001>
module attributes {stable_mosaic.version = 11 : i64} {
  func.func @dqn_kernel(%arg0: i32, %arg1: memref<2x16xf32, #tpu.memory_space<vmem>>, %arg2: memref<16x128xf32, #tpu.memory_space<vmem>>, %arg3: memref<1x128xf32, #tpu.memory_space<vmem>>, %arg4: memref<128x8xf32, #tpu.memory_space<vmem>>, %arg5: memref<1x8xf32, #tpu.memory_space<vmem>>, %arg6: memref<2x8xf32, #tpu.memory_space<vmem>>) attributes {dimension_semantics = [#tpu.dimension_semantics<parallel>], iteration_bounds = array<i64: 1>, scalar_prefetch = 0 : i64, scratch_operands = 0 : i64, tpu.core_type = #tpu.core_type<tc>, window_params = [{transform_indices = @transform_0, window_bounds = array<i64: 2, 16>}, {pipeline_mode = #tpu.pipeline_mode<synchronous>, transform_indices = @transform_1, window_bounds = array<i64: 16, 128>}, {pipeline_mode = #tpu.pipeline_mode<synchronous>, transform_indices = @transform_2, window_bounds = array<i64: 1, 128>}, {pipeline_mode = #tpu.pipeline_mode<synchronous>, transform_indices = @transform_3, window_bounds = array<i64: 128, 8>}, {pipeline_mode = #tpu.pipeline_mode<synchronous>, transform_indices = @transform_4, window_bounds = array<i64: 1, 8>}, {transform_indices = @transform_5, window_bounds = array<i64: 2, 8>}]} {
    %c0 = arith.constant 0 : index
    %c0_0 = arith.constant 0 : index
    %0 = vector.load %arg1[%c0, %c0_0] : memref<2x16xf32, #tpu.memory_space<vmem>>, vector<2x16xf32>
    %c0_1 = arith.constant 0 : index
    %c0_2 = arith.constant 0 : index
    %1 = vector.load %arg2[%c0_1, %c0_2] : memref<16x128xf32, #tpu.memory_space<vmem>>, vector<16x128xf32>
    %cst = arith.constant dense<0.000000e+00> : vector<2x128xf32>
    %2 = tpu.matmul %0, %1, %cst {dimension_numbers = #tpu.dot_dimension_numbers<[1], [0], [0], [1], [0, 0, 1, 1], [], []>} : vector<2x16xf32>, vector<16x128xf32>, vector<2x128xf32> -> vector<2x128xf32>
    %c0_3 = arith.constant 0 : index
    %c0_4 = arith.constant 0 : index
    %3 = vector.load %arg3[%c0_3, %c0_4] : memref<1x128xf32, #tpu.memory_space<vmem>>, vector<1x128xf32>
    %4 = vector.broadcast %3 : vector<1x128xf32> to vector<2x128xf32>
    %5 = arith.addf %2, %4 : vector<2x128xf32>
    %cst_5 = arith.constant 0.000000e+00 : f32
    %6 = vector.broadcast %cst_5 : f32 to vector<2x128xf32>
    %7 = arith.maximumf %5, %6 : vector<2x128xf32>
    %c0_6 = arith.constant 0 : index
    %c0_7 = arith.constant 0 : index
    %8 = vector.load %arg4[%c0_6, %c0_7] : memref<128x8xf32, #tpu.memory_space<vmem>>, vector<128x8xf32>
    %cst_8 = arith.constant dense<0.000000e+00> : vector<2x8xf32>
    %9 = tpu.matmul %7, %8, %cst_8 {dimension_numbers = #tpu.dot_dimension_numbers<[1], [0], [0], [1], [0, 0, 1, 1], [], []>} : vector<2x128xf32>, vector<128x8xf32>, vector<2x8xf32> -> vector<2x8xf32>
    %c0_9 = arith.constant 0 : index
    %c0_10 = arith.constant 0 : index
    %10 = vector.load %arg5[%c0_9, %c0_10] : memref<1x8xf32, #tpu.memory_space<vmem>>, vector<1x8xf32>
    %11 = vector.broadcast %10 : vector<1x8xf32> to vector<2x8xf32>
    %12 = arith.addf %9, %11 : vector<2x8xf32>
    %c0_11 = arith.constant 0 : index
    %c0_12 = arith.constant 0 : index
    %13 = vector.load %arg6[%c0_11, %c0_12] : memref<2x8xf32, #tpu.memory_space<vmem>>, vector<2x8xf32>
    tpu.vector_store %arg6[%c0_11, %c0_12], %12 {strides = array<i32>} : memref<2x8xf32, #tpu.memory_space<vmem>>, vector<2x8xf32>,
    return
  }
  func.func @transform_0(%arg0: i32) -> (i32, i32) {
    %c0_i32 = arith.constant 0 : i32
    %c0_i32_0 = arith.constant 0 : i32
    return %arg0, %c0_i32 : i32, i32
  }
  func.func @transform_1(%arg0: i32) -> (i32, i32) {
    %c0_i32 = arith.constant 0 : i32
    %c0_i32_0 = arith.constant 0 : i32
    %c0_i32_1 = arith.constant 0 : i32
    return %c0_i32, %c0_i32_0 : i32, i32
  }
  func.func @transform_2(%arg0: i32) -> (i32, i32) {
    %c0_i32 = arith.constant 0 : i32
    %c0_i32_0 = arith.constant 0 : i32
    %c0_i32_1 = arith.constant 0 : i32
    return %c0_i32, %c0_i32_0 : i32, i32
  }
  func.func @transform_3(%arg0: i32) -> (i32, i32) {
    %c0_i32 = arith.constant 0 : i32
    %c0_i32_0 = arith.constant 0 : i32
    %c0_i32_1 = arith.constant 0 : i32
    return %c0_i32, %c0_i32_0 : i32, i32
  }
  func.func @transform_4(%arg0: i32) -> (i32, i32) {
    %c0_i32 = arith.constant 0 : i32
    %c0_i32_0 = arith.constant 0 : i32
    %c0_i32_1 = arith.constant 0 : i32
    return %c0_i32, %c0_i32_0 : i32, i32
  }
  func.func @transform_5(%arg0: i32) -> (i32, i32) {
    %c0_i32 = arith.constant 0 : i32
    %c0_i32_0 = arith.constant 0 : i32
    return %arg0, %c0_i32 : i32, i32
  }
}

</mosaic_0001>

<llo_original>
// kernel: dqn_forward.1
$region0: #{dqn_forward.1}
  #allocation0 [shape = 'u32[]', space=smem, size = 0x4, offset = 0x4, fixed_abs, tag = 'smem constant byte address 0x4 - core index']
  #allocation1 [shape = 'u32[72,128]{1,0:T(1,128)}', space=vmem, size = 0x9000, scoped, tag = 'internal scratch']
  %s0 = inlined_call_operand.vmem [shape: f32[2,16], index: 0, kind: input, shape index: {}]
  %s1 = inlined_call_operand.vmem [shape: f32[16,128], index: 1, kind: input, shape index: {}]
  %s2 = inlined_call_operand.vmem [shape: f32[1,128], index: 2, kind: input, shape index: {}]
  %s3 = inlined_call_operand.vmem [shape: f32[128,8], index: 3, kind: input, shape index: {}]
  %s4 = inlined_call_operand.vmem [shape: f32[1,8], index: 4, kind: input, shape index: {}]
  %s5 = inlined_call_operand.hbm [shape: f32[2,8], index: 5, kind: output, shape index: {}]
  %s6 = sld [smem:[#allocation0]]
  $region30: #{dqn_forward.1} parent=0
    _
  %s8 = ssub.s32 1, %s6
  %s9 = scalar_select 0, %s8, %s6
  $region1: #{dqn_forward.1} parent=0
    #allocation2 [shape = 'u8[1024]{0}', space=vmem, size = 0x400, scoped, tag = 'output window, operand 0, single buffered']
    #allocation3 [shape = 's32[1]{0}', space=sflag, size = 0x4, scoped, tag = 'scoped memory for dqn_forward.1']
    %10 = vsyncpa [#allocation3], 0
    // Predicated region
    $region2: #{dqn_forward.1} parent=1 // pred_check
      _
    $region3: #{dqn_forward.1} parent=1 // pred_check_branch
      %12 = sbr.rel (0) target = $region5
    $region4: #{dqn_forward.1} parent=1 // pred_region
      _
    $region5: #{dqn_forward.1} parent=1 // pred_fallthru
      _
    // Predicated region
    $region6: #{dqn_forward.1} parent=1 // pred_check
      _
    $region7: #{dqn_forward.1} parent=1 // pred_check_branch
      %14 = sbr.rel (0) target = $region9
    $region8: #{dqn_forward.1} parent=1 // pred_region
      _
    $region9: #{dqn_forward.1} parent=1 // pred_fallthru
      _
    // Predicated region
    $region10: #{dqn_forward.1} parent=1 // pred_check
      _
    $region11: #{dqn_forward.1} parent=1 // pred_check_branch
      %16 = sbr.rel (0) target = $region13
    $region12: #{dqn_forward.1} parent=1 // pred_region
      _
    $region13: #{dqn_forward.1} parent=1 // pred_fallthru
      _
    // Predicated region
    $region14: #{dqn_forward.1} parent=1 // pred_check
      _
    $region15: #{dqn_forward.1} parent=1 // pred_check_branch
      %18 = sbr.rel (0) target = $region17
    $region16: #{dqn_forward.1} parent=1 // pred_region
      _
    $region17: #{dqn_forward.1} parent=1 // pred_fallthru
      _
    // Predicated region
    $region18: #{dqn_forward.1} parent=1 // pred_check
      _
    $region19: #{dqn_forward.1} parent=1 // pred_check_branch
      %20 = sbr.rel (0) target = $region21
    $region20: #{dqn_forward.1} parent=1 // pred_region
      _
    $region21: #{dqn_forward.1} parent=1 // pred_fallthru
      _
    %v21 = vld [vmem:[%s0] sm:$0x3]
    %v22 = vld [vmem:[%s1] sm:$0xff]
    %v23 = vld [vmem:[%s1 + $0x8] sm:$0xff]
    %v24 = vld [vmem:[%s2] sm:$0x1]
    %v26 = vperm.slane %v24, 0
    %vm28 = vcmask 130048
    %v30 = vsel %vm28, %v21, 0
    %32 = vmatpush.msra.mxu0 0.0
    %33 = vmatpush.msra.mxu0 0.0
    %34 = vmatpush.msra.mxu0 0.0
    %35 = vmatpush.msra.mxu0 0.0
    %36 = vmatpush.msra.mxu0 0.0
    %37 = vmatpush.msra.mxu0 0.0
    %38 = vmatpush.msra.mxu0 0.0
    %39 = vmatpush.msra.mxu0 0.0
    %40 = vmatpush.msra.mxu0 0.0
    %41 = vmatpush.msra.mxu0 0.0
    %42 = vmatpush.msra.mxu0 0.0
    %43 = vmatpush.msra.mxu0 0.0
    %44 = vmatpush.msra.mxu0 0.0
    %45 = vmatpush.msra.mxu0 0.0
    %46 = vmatpush.msra.mxu0 %v23
    %47 = vmatpush.msra.mxu0 %v22
    %48 = vmatmul.f32.gmra.mxu0 %v30
    %v49 = vpop.f32.mrf.mxu0
    %v50 = vadd.f32 %v26, %v49
    %51 = vdwg.mxu0
    %v52 = vmax.f32 %v50, 0.0
    %v53 = vld [vmem:[%s3] sm:$0xff]
    %v54 = vld [vmem:[%s3 + $0x8] sm:$0xff]
    %v55 = vld [vmem:[%s3 + $0x10] sm:$0xff]
    %v56 = vld [vmem:[%s3 + $0x18] sm:$0xff]
    %v57 = vld [vmem:[%s3 + $0x20] sm:$0xff]
    %v58 = vld [vmem:[%s3 + $0x28] sm:$0xff]
    %v59 = vld [vmem:[%s3 + $0x30] sm:$0xff]
    %v60 = vld [vmem:[%s3 + $0x38] sm:$0xff]
    %v61 = vld [vmem:[%s3 + $0x40] sm:$0xff]
    %v62 = vld [vmem:[%s3 + $0x48] sm:$0xff]
    %v63 = vld [vmem:[%s3 + $0x50] sm:$0xff]
    %v64 = vld [vmem:[%s3 + $0x58] sm:$0xff]
    %v65 = vld [vmem:[%s3 + $0x60] sm:$0xff]
    %v66 = vld [vmem:[%s3 + $0x68] sm:$0xff]
    %v67 = vld [vmem:[%s3 + $0x70] sm:$0xff]
    %v68 = vld [vmem:[%s3 + $0x78] sm:$0xff]
    %v69 = vld [vmem:[%s4] sm:$0x1]
    %v71 = vperm.slane %v69, 0
    %73 = vmatpush.msra.mxu0 %v68
    %74 = vmatpush.msra.mxu0 %v67
    %75 = vmatpush.msra.mxu0 %v66
    %76 = vmatpush.msra.mxu0 %v65
    %77 = vmatpush.msra.mxu0 %v64
    %78 = vmatpush.msra.mxu0 %v63
    %79 = vmatpush.msra.mxu0 %v62
    %80 = vmatpush.msra.mxu0 %v61
    %81 = vmatpush.msra.mxu0 %v60
    %82 = vmatpush.msra.mxu0 %v59
    %83 = vmatpush.msra.mxu0 %v58
    %84 = vmatpush.msra.mxu0 %v57
    %85 = vmatpush.msra.mxu0 %v56
    %86 = vmatpush.msra.mxu0 %v55
    %87 = vmatpush.msra.mxu0 %v54
    %88 = vmatpush.msra.mxu0 %v53
    %89 = vmatmul.f32.gmra.mxu0 %v52
    %v90 = vpop.f32.mrf.mxu0
    %v91 = vadd.f32 %v71, %v90
    %92 = vdwg.mxu0
    %vm93 = vcmask 58368
    %94 = vst.msk [vmem:[#allocation2] sm:$0x3] %vm93, %v91
    // Predicated region
    $region22: #{dqn_forward.1} parent=1 // pred_check
      _
    $region23: #{dqn_forward.1} parent=1 // pred_check_branch
      %96 = sbr.rel (0) target = $region25
    $region24: #{dqn_forward.1} parent=1 // pred_region
      %98 = vsyncadd [#allocation3], 0
      %s100 = sshll.u32 [#allocation2], 4
      %s101 = int_to_ptr.vmem [resolvable:$true] %s100
      %s102 = sshll.u32 %s5, 4
      %s103 = int_to_ptr.hbm [resolvable:$true] %s102
      %105 = dma.vmem_to_hbm [thread:$0]  %s101, 32, %s103, [#allocation3]
    $region25: #{dqn_forward.1} parent=1 // pred_fallthru
      _
    // Predicated region
    $region26: #{dqn_forward.1} parent=1 // pred_check
      _
    $region27: #{dqn_forward.1} parent=1 // pred_check_branch
      %107 = sbr.rel (0) target = $region29
    $region28: #{dqn_forward.1} parent=1 // pred_region
      %109 = dma.done [#allocation3], 32
    $region29: #{dqn_forward.1} parent=1 // pred_fallthru
      _
    %110 = vsyncpa [#allocation3], 1

</llo_original>
